<compile_context>
chip_gen: v7x
topology: tpu7x:2x2x1
jax: 0.10.0
libtpu: 0.0.40
codegen_flags: <defaults>
</compile_context>

<pallas_src>
import jax
import jax.numpy as jnp
from jax.experimental import pallas as pl
from jax.experimental.pallas import tpu as pltpu

LANES = 128  # native lane width


def _round_up(n, m):
    return ((n + m - 1) // m) * m


def irisnet_kernel(x_ref, w1_ref, b1_ref, w2_ref, b2_ref, o_ref):
    """Fused row-packed MLP tile: o = relu(x @ W1_bd + b1_bd) @ W2_bd + b2_bd.

    x_ref/o_ref are (TB, 128)/(TB, 96) streaming tiles (32 samples per row);
    block-diagonal weights + tiled biases are VMEM-resident for the whole grid.
    Both dots accumulate in f32 on the MXU; bias add + ReLU run in f32 on the VPU.
    """
    x = x_ref[...]                                                   # (TB, in_pack)
    h = jnp.dot(x, w1_ref[...], preferred_element_type=jnp.float32) + b1_ref[...]
    h = jnp.maximum(h, 0.0).astype(w2_ref.dtype)                     # ReLU in f32
    o = jnp.dot(h, w2_ref[...], preferred_element_type=jnp.float32) + b2_ref[...]
    o_ref[...] = o.astype(o_ref.dtype)                               # lane-dense store


def irisnet_forward(x, w1, b1, w2, b2, *, block_rows=256, use_bf16=False):
    """x: (B, input_size) f32; weights stored as (in, out). Returns (B, out) f32."""
    B, in_size = x.shape
    hidden = w1.shape[1]
    out_size = w2.shape[1]

    # Row-packing factor: how many samples fit in one 128-lane vector row.
    pack = max(1, LANES // in_size)           # 32 for in_size=4
    in_pack = pack * in_size                  # 128 (lane-dense input rows)
    hid_dense = pack * hidden                 # 320
    hid_pack = _round_up(hid_dense, LANES)    # 384 — VMEM-only, free to pad
    out_pack = pack * out_size                # 96  (lane-dense output rows)

    cdtype = jnp.bfloat16 if use_bf16 else jnp.float32
    odtype = jnp.bfloat16 if use_bf16 else jnp.float32
    c_bytes = 2 if use_bf16 else 4

    # Packed-row count and batch tile (always a multiple of 8 sublanes).
    rows = pl.cdiv(B, pack)
    tb = _round_up(max(8, min(int(block_rows), rows)), 8)
    if rows >= 16:
        # Keep >= 2 grid steps so the "parallel" batch axis feeds both v7x TCs.
        tb = min(tb, _round_up(pl.cdiv(rows, 2), 8))
    rows_p = _round_up(rows, tb)
    grid = (rows_p // tb,)
    b_pad = rows_p * pack

    # Pack x: (B, in) -> (rows_p, pack*in). Row-major reshape (pure reinterpret);
    # only the batch tail is zero-padded — no feature-dim padding hits HBM.
    xp = x.astype(cdtype)
    if b_pad != B:
        xp = jnp.zeros((b_pad, in_size), cdtype).at[:B].set(xp)
    xp = xp.reshape(rows_p, in_pack)

    # Block-diagonal weights: each of the `pack` packed sub-rows gets its own copy.
    eye = jnp.eye(pack, dtype=jnp.float32)
    w1_bd = jnp.kron(eye, w1.astype(jnp.float32))                        # (in_pack, hid_dense)
    w1_bd = jnp.zeros((in_pack, hid_pack), jnp.float32).at[:, :hid_dense].set(w1_bd)
    w2_bd = jnp.kron(eye, w2.astype(jnp.float32))                        # (hid_dense, out_pack)
    w2_bd = jnp.zeros((hid_pack, out_pack), jnp.float32).at[:hid_dense, :].set(w2_bd)
    b1_bd = jnp.zeros((1, hid_pack), jnp.float32).at[0, :hid_dense].set(
        jnp.tile(b1.astype(jnp.float32), pack))
    b2_bd = jnp.tile(b2.astype(jnp.float32), pack).reshape(1, out_pack)
    w1_bd = w1_bd.astype(cdtype)
    w2_bd = w2_bd.astype(cdtype)

    cost = pl.CostEstimate(
        flops=2 * rows_p * (in_pack * hid_pack + hid_pack * out_pack),
        transcendentals=0,
        bytes_accessed=(rows_p * (in_pack + out_pack) * c_bytes
                        + (in_pack * hid_pack + hid_pack * out_pack) * c_bytes),
    )

    out = pl.pallas_call(
        irisnet_kernel,
        out_shape=jax.ShapeDtypeStruct((rows_p, out_pack), odtype),
        grid_spec=pltpu.PrefetchScalarGridSpec(
            num_scalar_prefetch=0,
            grid=grid,
            in_specs=[
                pl.BlockSpec((tb, in_pack), lambda i: (i, 0)),       # x: streams over batch
                pl.BlockSpec((in_pack, hid_pack), lambda i: (0, 0)), # W1_bd: VMEM-resident
                pl.BlockSpec((1, hid_pack), lambda i: (0, 0)),       # b1_bd: VMEM-resident
                pl.BlockSpec((hid_pack, out_pack), lambda i: (0, 0)),# W2_bd: VMEM-resident
                pl.BlockSpec((1, out_pack), lambda i: (0, 0)),       # b2_bd: VMEM-resident
            ],
            out_specs=pl.BlockSpec((tb, out_pack), lambda i: (i, 0)),
        ),
        compiler_params=pltpu.CompilerParams(
            dimension_semantics=("parallel",),     # shard batch tiles across v7x's 2 TCs
            vmem_limit_bytes=32 * 1024 * 1024,     # explicit budget, safe on all gens
        ),
        cost_estimate=cost,
    )(xp, w1_bd, b1_bd, w2_bd, b2_bd)

    # Unpack (rows_p, pack*out) -> (rows_p*pack, out) and drop padded rows.
    out = out.reshape(rows_p * pack, out_size)[:B]
    return out.astype(jnp.float32)


def init_params(key, input_size=4, hidden_size=10, output_size=3):
    """nn.Linear-style U(-1/sqrt(fan_in), 1/sqrt(fan_in)); weights as (in, out)."""
    k1, k2, k3, k4 = jax.random.split(key, 4)
    bound1 = 1.0 / jnp.sqrt(input_size)
    bound2 = 1.0 / jnp.sqrt(hidden_size)
    w1 = jax.random.uniform(k1, (input_size, hidden_size), jnp.float32, -bound1, bound1)
    b1 = jax.random.uniform(k2, (hidden_size,), jnp.float32, -bound1, bound1)
    w2 = jax.random.uniform(k3, (hidden_size, output_size), jnp.float32, -bound2, bound2)
    b2 = jax.random.uniform(k4, (output_size,), jnp.float32, -bound2, bound2)
    return w1, b1, w2, b2


if __name__ == "__main__":
    key = jax.random.PRNGKey(0)
    k_x, k_p, k_odd, k_xl = jax.random.split(key, 4)

    input_size, hidden_size, output_size = 4, 10, 3
    w1, b1, w2, b2 = init_params(k_p, input_size, hidden_size, output_size)

    def ref_fn(x):
        return jnp.maximum(x @ w1 + b1, 0.0) @ w2 + b2

    # Small batch (typical IrisNet usage): single packed tile, grid=(1,).
    x_small = jax.random.normal(k_x, (8, input_size), dtype=jnp.float32)
    out_small = irisnet_forward(x_small, w1, b1, w2, b2)
    jax.block_until_ready(out_small)
    assert out_small.shape == (8, output_size)
    assert jnp.allclose(out_small, ref_fn(x_small), atol=1e-5, rtol=1e-5)

    # Odd batch (not a multiple of the 32-row pack factor): exercises tail padding.
    x_odd = jax.random.normal(k_odd, (150, input_size), dtype=jnp.float32)
    out_odd = irisnet_forward(x_odd, w1, b1, w2, b2)
    jax.block_until_ready(out_odd)
    assert out_odd.shape == (150, output_size)
    assert jnp.allclose(out_odd, ref_fn(x_odd), atol=1e-5, rtol=1e-5)

    # Large batch: streaming grid with >= 2 tiles (both v7x TensorCores active).
    x_large = jax.random.normal(k_xl, (8192, input_size), dtype=jnp.float32)
    out_large = irisnet_forward(x_large, w1, b1, w2, b2)
    jax.block_until_ready(out_large)
    assert out_large.shape == (8192, output_size)
    assert jnp.allclose(out_large, ref_fn(x_large), atol=1e-5, rtol=1e-5)

    # bf16 in/out streaming path (halves the already-minimal HBM traffic on v6e/v7x).
    out_bf16 = irisnet_forward(x_large, w1, b1, w2, b2, use_bf16=True)
    jax.block_until_ready(out_bf16)
    assert jnp.allclose(out_bf16, ref_fn(x_large), atol=5e-2, rtol=5e-2)

    print("KERNEL_OK")
</pallas_src>

<mosaic_0001>
module attributes {stable_mosaic.version = 11 : i64} {
  func.func @irisnet_kernel(%arg0: i32, %arg1: memref<8x128xf32, #tpu.memory_space<vmem>>, %arg2: memref<128x384xf32, #tpu.memory_space<vmem>>, %arg3: memref<1x384xf32, #tpu.memory_space<vmem>>, %arg4: memref<384x96xf32, #tpu.memory_space<vmem>>, %arg5: memref<1x96xf32, #tpu.memory_space<vmem>>, %arg6: memref<8x96xf32, #tpu.memory_space<vmem>>) attributes {dimension_semantics = [#tpu.dimension_semantics<parallel>], iteration_bounds = array<i64: 1>, scalar_prefetch = 0 : i64, scratch_operands = 0 : i64, tpu.core_type = #tpu.core_type<tc>, window_params = [{transform_indices = @transform_0, window_bounds = array<i64: 8, 128>}, {pipeline_mode = #tpu.pipeline_mode<synchronous>, transform_indices = @transform_1, window_bounds = array<i64: 128, 384>}, {pipeline_mode = #tpu.pipeline_mode<synchronous>, transform_indices = @transform_2, window_bounds = array<i64: 1, 384>}, {pipeline_mode = #tpu.pipeline_mode<synchronous>, transform_indices = @transform_3, window_bounds = array<i64: 384, 96>}, {pipeline_mode = #tpu.pipeline_mode<synchronous>, transform_indices = @transform_4, window_bounds = array<i64: 1, 96>}, {transform_indices = @transform_5, window_bounds = array<i64: 8, 96>}]} {
    %c0 = arith.constant 0 : index
    %c0_0 = arith.constant 0 : index
    %0 = vector.load %arg1[%c0, %c0_0] : memref<8x128xf32, #tpu.memory_space<vmem>>, vector<8x128xf32>
    %c0_1 = arith.constant 0 : index
    %c0_2 = arith.constant 0 : index
    %1 = vector.load %arg2[%c0_1, %c0_2] : memref<128x384xf32, #tpu.memory_space<vmem>>, vector<128x384xf32>
    %cst = arith.constant dense<0.000000e+00> : vector<8x384xf32>
    %2 = tpu.matmul %0, %1, %cst {dimension_numbers = #tpu.dot_dimension_numbers<[1], [0], [0], [1], [0, 0, 1, 1], [], []>} : vector<8x128xf32>, vector<128x384xf32>, vector<8x384xf32> -> vector<8x384xf32>
    %c0_3 = arith.constant 0 : index
    %c0_4 = arith.constant 0 : index
    %3 = vector.load %arg3[%c0_3, %c0_4] : memref<1x384xf32, #tpu.memory_space<vmem>>, vector<1x384xf32>
    %4 = vector.broadcast %3 : vector<1x384xf32> to vector<8x384xf32>
    %5 = arith.addf %2, %4 : vector<8x384xf32>
    %cst_5 = arith.constant 0.000000e+00 : f32
    %6 = vector.broadcast %cst_5 : f32 to vector<8x384xf32>
    %7 = arith.maximumf %5, %6 : vector<8x384xf32>
    %c0_6 = arith.constant 0 : index
    %c0_7 = arith.constant 0 : index
    %8 = vector.load %arg4[%c0_6, %c0_7] : memref<384x96xf32, #tpu.memory_space<vmem>>, vector<384x96xf32>
    %cst_8 = arith.constant dense<0.000000e+00> : vector<8x96xf32>
    %9 = tpu.matmul %7, %8, %cst_8 {dimension_numbers = #tpu.dot_dimension_numbers<[1], [0], [0], [1], [0, 0, 1, 1], [], []>} : vector<8x384xf32>, vector<384x96xf32>, vector<8x96xf32> -> vector<8x96xf32>
    %c0_9 = arith.constant 0 : index
    %c0_10 = arith.constant 0 : index
    %10 = vector.load %arg5[%c0_9, %c0_10] : memref<1x96xf32, #tpu.memory_space<vmem>>, vector<1x96xf32>
    %11 = vector.broadcast %10 : vector<1x96xf32> to vector<8x96xf32>
    %12 = arith.addf %9, %11 : vector<8x96xf32>
    %c0_11 = arith.constant 0 : index
    %c0_12 = arith.constant 0 : index
    %13 = vector.load %arg6[%c0_11, %c0_12] : memref<8x96xf32, #tpu.memory_space<vmem>>, vector<8x96xf32>
    tpu.vector_store %arg6[%c0_11, %c0_12], %12 {strides = array<i32>} : memref<8x96xf32, #tpu.memory_space<vmem>>, vector<8x96xf32>,
    return
  }
  func.func @transform_0(%arg0: i32) -> (i32, i32) {
    %c0_i32 = arith.constant 0 : i32
    %c0_i32_0 = arith.constant 0 : i32
    return %arg0, %c0_i32 : i32, i32
  }
  func.func @transform_1(%arg0: i32) -> (i32, i32) {
    %c0_i32 = arith.constant 0 : i32
    %c0_i32_0 = arith.constant 0 : i32
    %c0_i32_1 = arith.constant 0 : i32
    return %c0_i32, %c0_i32_0 : i32, i32
  }
  func.func @transform_2(%arg0: i32) -> (i32, i32) {
    %c0_i32 = arith.constant 0 : i32
    %c0_i32_0 = arith.constant 0 : i32
    %c0_i32_1 = arith.constant 0 : i32
    return %c0_i32, %c0_i32_0 : i32, i32
  }
  func.func @transform_3(%arg0: i32) -> (i32, i32) {
    %c0_i32 = arith.constant 0 : i32
    %c0_i32_0 = arith.constant 0 : i32
    %c0_i32_1 = arith.constant 0 : i32
    return %c0_i32, %c0_i32_0 : i32, i32
  }
  func.func @transform_4(%arg0: i32) -> (i32, i32) {
    %c0_i32 = arith.constant 0 : i32
    %c0_i32_0 = arith.constant 0 : i32
    %c0_i32_1 = arith.constant 0 : i32
    return %c0_i32, %c0_i32_0 : i32, i32
  }
  func.func @transform_5(%arg0: i32) -> (i32, i32) {
    %c0_i32 = arith.constant 0 : i32
    %c0_i32_0 = arith.constant 0 : i32
    return %arg0, %c0_i32 : i32, i32
  }
}

</mosaic_0001>

<llo_original>
// kernel: tpu_custom_call.1
$region0: #{tpu_custom_call.1}
  #allocation0 [shape = 'u32[]', space=smem, size = 0x4, offset = 0x4, fixed_abs, tag = 'smem constant byte address 0x4 - core index']
  #allocation1 [shape = 'u32[144,128]{1,0:T(1,128)}', space=vmem, size = 0x12000, scoped, tag = 'internal scratch']
  %s0 = inlined_call_operand.vmem [shape: f32[8,128], index: 0, kind: input, shape index: {}]
  %s1 = inlined_call_operand.vmem [shape: f32[128,384], index: 1, kind: input, shape index: {}]
  %s2 = inlined_call_operand.vmem [shape: f32[1,384], index: 2, kind: input, shape index: {}]
  %s3 = inlined_call_operand.vmem [shape: f32[384,96], index: 3, kind: input, shape index: {}]
  %s4 = inlined_call_operand.vmem [shape: f32[1,96], index: 4, kind: input, shape index: {}]
  %s5 = inlined_call_operand.hbm [shape: f32[8,96], index: 5, kind: output, shape index: {}]
  %s6 = sld [smem:[#allocation0]]
  $region30: #{tpu_custom_call.1} parent=0
    _
  %s8 = ssub.s32 1, %s6
  %s9 = scalar_select 0, %s8, %s6
  $region1: #{tpu_custom_call.1} parent=0
    #allocation2 [shape = 'u8[4096]{0}', space=vmem, size = 0x1000, scoped, tag = 'output window, operand 0, single buffered']
    #allocation3 [shape = 's32[1]{0}', space=sflag, size = 0x4, scoped, tag = 'scoped memory for tpu_custom_call.1']
    %10 = vsyncpa [#allocation3], 0
    // Predicated region
    $region2: #{tpu_custom_call.1} parent=1 // pred_check
      _
    $region3: #{tpu_custom_call.1} parent=1 // pred_check_branch
      %12 = sbr.rel (0) target = $region5
    $region4: #{tpu_custom_call.1} parent=1 // pred_region
      _
    $region5: #{tpu_custom_call.1} parent=1 // pred_fallthru
      _
    // Predicated region
    $region6: #{tpu_custom_call.1} parent=1 // pred_check
      _
    $region7: #{tpu_custom_call.1} parent=1 // pred_check_branch
      %14 = sbr.rel (0) target = $region9
    $region8: #{tpu_custom_call.1} parent=1 // pred_region
      _
    $region9: #{tpu_custom_call.1} parent=1 // pred_fallthru
      _
    // Predicated region
    $region10: #{tpu_custom_call.1} parent=1 // pred_check
      _
    $region11: #{tpu_custom_call.1} parent=1 // pred_check_branch
      %16 = sbr.rel (0) target = $region13
    $region12: #{tpu_custom_call.1} parent=1 // pred_region
      _
    $region13: #{tpu_custom_call.1} parent=1 // pred_fallthru
      _
    // Predicated region
    $region14: #{tpu_custom_call.1} parent=1 // pred_check
      _
    $region15: #{tpu_custom_call.1} parent=1 // pred_check_branch
      %18 = sbr.rel (0) target = $region17
    $region16: #{tpu_custom_call.1} parent=1 // pred_region
      _
    $region17: #{tpu_custom_call.1} parent=1 // pred_fallthru
      _
    // Predicated region
    $region18: #{tpu_custom_call.1} parent=1 // pred_check
      _
    $region19: #{tpu_custom_call.1} parent=1 // pred_check_branch
      %20 = sbr.rel (0) target = $region21
    $region20: #{tpu_custom_call.1} parent=1 // pred_region
      _
    $region21: #{tpu_custom_call.1} parent=1 // pred_fallthru
      _
    %v21 = vld [vmem:[%s0] sm:$0xff]
    %v22 = vld [vmem:[%s1] sm:$0xff]
    %v23 = vld [vmem:[%s1 + $0x8] sm:$0xff]
    %v24 = vld [vmem:[%s1 + $0x10] sm:$0xff]
    %v25 = vld [vmem:[%s1 + $0x18] sm:$0xff]
    %v26 = vld [vmem:[%s1 + $0x20] sm:$0xff]
    %v27 = vld [vmem:[%s1 + $0x28] sm:$0xff]
    %v28 = vld [vmem:[%s1 + $0x30] sm:$0xff]
    %v29 = vld [vmem:[%s1 + $0x38] sm:$0xff]
    %v30 = vld [vmem:[%s1 + $0x40] sm:$0xff]
    %v31 = vld [vmem:[%s1 + $0x48] sm:$0xff]
    %v32 = vld [vmem:[%s1 + $0x50] sm:$0xff]
    %v33 = vld [vmem:[%s1 + $0x58] sm:$0xff]
    %v34 = vld [vmem:[%s1 + $0x60] sm:$0xff]
    %v35 = vld [vmem:[%s1 + $0x68] sm:$0xff]
    %v36 = vld [vmem:[%s1 + $0x70] sm:$0xff]
    %v37 = vld [vmem:[%s1 + $0x78] sm:$0xff]
    %v38 = vld [vmem:[%s1 + $0x80] sm:$0xff]
    %v39 = vld [vmem:[%s1 + $0x88] sm:$0xff]
    %v40 = vld [vmem:[%s1 + $0x90] sm:$0xff]
    %v41 = vld [vmem:[%s1 + $0x98] sm:$0xff]
    %v42 = vld [vmem:[%s1 + $0xa0] sm:$0xff]
    %v43 = vld [vmem:[%s1 + $0xa8] sm:$0xff]
    %v44 = vld [vmem:[%s1 + $0xb0] sm:$0xff]
    %v45 = vld [vmem:[%s1 + $0xb8] sm:$0xff]
    %v46 = vld [vmem:[%s1 + $0xc0] sm:$0xff]
    %v47 = vld [vmem:[%s1 + $0xc8] sm:$0xff]
    %v48 = vld [vmem:[%s1 + $0xd0] sm:$0xff]
    %v49 = vld [vmem:[%s1 + $0xd8] sm:$0xff]
    %v50 = vld [vmem:[%s1 + $0xe0] sm:$0xff]
    %v51 = vld [vmem:[%s1 + $0xe8] sm:$0xff]
    %v52 = vld [vmem:[%s1 + $0xf0] sm:$0xff]
    %v53 = vld [vmem:[%s1 + $0xf8] sm:$0xff]
    %v54 = vld [vmem:[%s1 + $0x100] sm:$0xff]
    %v55 = vld [vmem:[%s1 + $0x108] sm:$0xff]
    %v56 = vld [vmem:[%s1 + $0x110] sm:$0xff]
    %v57 = vld [vmem:[%s1 + $0x118] sm:$0xff]
    %v58 = vld [vmem:[%s1 + $0x120] sm:$0xff]
    %v59 = vld [vmem:[%s1 + $0x128] sm:$0xff]
    %v60 = vld [vmem:[%s1 + $0x130] sm:$0xff]
    %v61 = vld [vmem:[%s1 + $0x138] sm:$0xff]
    %v62 = vld [vmem:[%s1 + $0x140] sm:$0xff]
    %v63 = vld [vmem:[%s1 + $0x148] sm:$0xff]
    %v64 = vld [vmem:[%s1 + $0x150] sm:$0xff]
    %v65 = vld [vmem:[%s1 + $0x158] sm:$0xff]
    %v66 = vld [vmem:[%s1 + $0x160] sm:$0xff]
    %v67 = vld [vmem:[%s1 + $0x168] sm:$0xff]
    %v68 = vld [vmem:[%s1 + $0x170] sm:$0xff]
    %v69 = vld [vmem:[%s1 + $0x178] sm:$0xff]
    %v70 = vld [vmem:[%s2] sm:$0x7]
    %v72 = vlaneseq
    %v73 = vshrl.u32 %v72, 7
    %v74 = vsub.s32 0, %v73
    %v75 = vrot.slane %v70, %v74
    %v76 = vlaneseq
    %v77 = vshrl.u32 %v76, 7
    %v78 = vsub.s32 1, %v77
    %v79 = vrot.slane %v70, %v78
    %v80 = vlaneseq
    %v81 = vshrl.u32 %v80, 7
    %v82 = vsub.s32 2, %v81
    %v83 = vrot.slane %v70, %v82
    %87 = vmatprep.subr.mxu0 %v23
    %88 = vmatpush1.msra.mxu0 %v22
    %89 = vmatprep.subr.mxu0 %v26
    %90 = vmatpush1.msra.mxu0 %v25
    %91 = vmatprep.subr.mxu0 %v29
    %92 = vmatpush1.msra.mxu0 %v28
    %93 = vmatprep.subr.mxu0 %v32
    %94 = vmatpush1.msra.mxu0 %v31
    %95 = vmatprep.subr.mxu0 %v35
    %96 = vmatpush1.msra.mxu0 %v34
    %97 = vmatprep.subr.mxu0 %v38
    %98 = vmatpush1.msra.mxu0 %v37
    %99 = vmatprep.subr.mxu0 %v41
    %100 = vmatpush1.msra.mxu0 %v40
    %101 = vmatprep.subr.mxu0 %v44
    %102 = vmatpush1.msra.mxu0 %v43
    %103 = vmatprep.subr.mxu0 %v47
    %104 = vmatpush1.msra.mxu0 %v46
    %105 = vmatprep.subr.mxu0 %v50
    %106 = vmatpush1.msra.mxu0 %v49
    %107 = vmatprep.subr.mxu0 %v53
    %108 = vmatpush1.msra.mxu0 %v52
    %109 = vmatprep.subr.mxu0 %v56
    %110 = vmatpush1.msra.mxu0 %v55
    %111 = vmatprep.subr.mxu0 %v59
    %112 = vmatpush1.msra.mxu0 %v58
    %113 = vmatprep.subr.mxu0 %v62
    %114 = vmatpush1.msra.mxu0 %v61
    %115 = vmatprep.subr.mxu0 %v65
    %116 = vmatpush1.msra.mxu0 %v64
    %117 = vmatprep.subr.mxu0 %v68
    %118 = vmatpush1.msra.mxu0 %v67
    %119 = vmatprep.subr.mxu0 0.0
    %120 = vmatpush1.msra.mxu0 0.0
    %121 = vmatprep.subr.mxu0 0.0
    %122 = vmatpush1.msra.mxu0 0.0
    %123 = vmatprep.subr.mxu0 0.0
    %124 = vmatpush1.msra.mxu0 0.0
    %125 = vmatprep.subr.mxu0 0.0
    %126 = vmatpush1.msra.mxu0 0.0
    %127 = vmatprep.subr.mxu0 0.0
    %128 = vmatpush1.msra.mxu0 0.0
    %129 = vmatprep.subr.mxu0 0.0
    %130 = vmatpush1.msra.mxu0 0.0
    %131 = vmatprep.subr.mxu0 0.0
    %132 = vmatpush1.msra.mxu0 0.0
    %133 = vmatprep.subr.mxu0 0.0
    %134 = vmatpush1.msra.mxu0 0.0
    %135 = vmatprep.subr.mxu0 0.0
    %136 = vmatpush1.msra.mxu0 0.0
    %137 = vmatprep.subr.mxu0 0.0
    %138 = vmatpush1.msra.mxu0 0.0
    %139 = vmatprep.subr.mxu0 0.0
    %140 = vmatpush1.msra.mxu0 0.0
    %141 = vmatprep.subr.mxu0 0.0
    %142 = vmatpush1.msra.mxu0 0.0
    %143 = vmatprep.subr.mxu0 0.0
    %144 = vmatpush1.msra.mxu0 0.0
    %145 = vmatprep.subr.mxu0 0.0
    %146 = vmatpush1.msra.mxu0 0.0
    %147 = vmatprep.subr.mxu0 0.0
    %148 = vmatpush1.msra.mxu0 0.0
    %149 = vmatprep.subr.mxu0 0.0
    %150 = vmatpush1.msra.mxu0 0.0
    %151 = vmatprep.mubr.f32.mxu0 0.0
    %152 = vmatmul.mubr.f32.gmra.mrb[0].mxu0 %v21
    %v153 = vpop.f32.mrb[0].mxu0
    %v154 = vadd.f32 %v75, %v153
    %v155 = vpop.f32.mrb[0].mxu0
    %v156 = vadd.f32 %v79, %v155
    %157 = vdwg.mxu0
    %158 = vmatprep.subr.mxu0 0.0
    %159 = vmatpush1.msra.mxu0 %v24
    %160 = vmatprep.subr.mxu0 0.0
    %161 = vmatpush1.msra.mxu0 %v27
    %162 = vmatprep.subr.mxu0 0.0
    %163 = vmatpush1.msra.mxu0 %v30
    %164 = vmatprep.subr.mxu0 0.0
    %165 = vmatpush1.msra.mxu0 %v33
    %166 = vmatprep.subr.mxu0 0.0
    %167 = vmatpush1.msra.mxu0 %v36
    %168 = vmatprep.subr.mxu0 0.0
    %169 = vmatpush1.msra.mxu0 %v39
    %170 = vmatprep.subr.mxu0 0.0
    %171 = vmatpush1.msra.mxu0 %v42
    %172 = vmatprep.subr.mxu0 0.0
    %173 = vmatpush1.msra.mxu0 %v45
    %174 = vmatprep.subr.mxu0 0.0
    %175 = vmatpush1.msra.mxu0 %v48
    %176 = vmatprep.subr.mxu0 0.0
    %177 = vmatpush1.msra.mxu0 %v51
    %178 = vmatprep.subr.mxu0 0.0
    %179 = vmatpush1.msra.mxu0 %v54
    %180 = vmatprep.subr.mxu0 0.0
    %181 = vmatpush1.msra.mxu0 %v57
    %182 = vmatprep.subr.mxu0 0.0
    %183 = vmatpush1.msra.mxu0 %v60
    %184 = vmatprep.subr.mxu0 0.0
    %185 = vmatpush1.msra.mxu0 %v63
    %186 = vmatprep.subr.mxu0 0.0
    %187 = vmatpush1.msra.mxu0 %v66
    %188 = vmatprep.subr.mxu0 0.0
    %189 = vmatpush1.msra.mxu0 %v69
    %190 = vmatprep.subr.mxu0 0.0
    %191 = vmatpush1.msra.mxu0 0.0
    %192 = vmatprep.subr.mxu0 0.0
    %193 = vmatpush1.msra.mxu0 0.0
    %194 = vmatprep.subr.mxu0 0.0
    %195 = vmatpush1.msra.mxu0 0.0
    %196 = vmatprep.subr.mxu0 0.0
    %197 = vmatpush1.msra.mxu0 0.0
    %198 = vmatprep.subr.mxu0 0.0
    %199 = vmatpush1.msra.mxu0 0.0
    %200 = vmatprep.subr.mxu0 0.0
    %201 = vmatpush1.msra.mxu0 0.0
    %202 = vmatprep.subr.mxu0 0.0
    %203 = vmatpush1.msra.mxu0 0.0
    %204 = vmatprep.subr.mxu0 0.0
    %205 = vmatpush1.msra.mxu0 0.0
    %206 = vmatprep.subr.mxu0 0.0
    %207 = vmatpush1.msra.mxu0 0.0
    %208 = vmatprep.subr.mxu0 0.0
    %209 = vmatpush1.msra.mxu0 0.0
    %210 = vmatprep.subr.mxu0 0.0
    %211 = vmatpush1.msra.mxu0 0.0
    %212 = vmatprep.subr.mxu0 0.0
    %213 = vmatpush1.msra.mxu0 0.0
    %214 = vmatprep.subr.mxu0 0.0
    %215 = vmatpush1.msra.mxu0 0.0
    %216 = vmatprep.subr.mxu0 0.0
    %217 = vmatpush1.msra.mxu0 0.0
    %218 = vmatprep.subr.mxu0 0.0
    %219 = vmatpush1.msra.mxu0 0.0
    %220 = vmatprep.subr.mxu0 0.0
    %221 = vmatpush1.msra.mxu0 0.0
    %222 = vmatprep.mubr.f32.mxu0 0.0
    %223 = vmatmul.mubr.f32.gmra.mrb[0].mxu0 %v21
    %v224 = vpop.f32.mrb[0].mxu0
    %v225 = vadd.f32 %v83, %v224
    %v226 = vpop.f32.mrb[0].mxu0
    %227 = vdwg.mxu0
    %v228 = vmax.f32 %v154, 0.0
    %v229 = vmax.f32 %v156, 0.0
    %v230 = vmax.f32 %v225, 0.0
    %v231 = vld [vmem:[%s3] sm:$0xff]
    %v232 = vld [vmem:[%s3 + $0x8] sm:$0xff]
    %v233 = vld [vmem:[%s3 + $0x10] sm:$0xff]
    %v234 = vld [vmem:[%s3 + $0x18] sm:$0xff]
    %v235 = vld [vmem:[%s3 + $0x20] sm:$0xff]
    %v236 = vld [vmem:[%s3 + $0x28] sm:$0xff]
    %v237 = vld [vmem:[%s3 + $0x30] sm:$0xff]
    %v238 = vld [vmem:[%s3 + $0x38] sm:$0xff]
    %v239 = vld [vmem:[%s3 + $0x40] sm:$0xff]
    %v240 = vld [vmem:[%s3 + $0x48] sm:$0xff]
    %v241 = vld [vmem:[%s3 + $0x50] sm:$0xff]
    %v242 = vld [vmem:[%s3 + $0x58] sm:$0xff]
    %v243 = vld [vmem:[%s3 + $0x60] sm:$0xff]
    %v244 = vld [vmem:[%s3 + $0x68] sm:$0xff]
    %v245 = vld [vmem:[%s3 + $0x70] sm:$0xff]
    %v246 = vld [vmem:[%s3 + $0x78] sm:$0xff]
    %v247 = vld [vmem:[%s3 + $0x80] sm:$0xff]
    %v248 = vld [vmem:[%s3 + $0x88] sm:$0xff]
    %v249 = vld [vmem:[%s3 + $0x90] sm:$0xff]
    %v250 = vld [vmem:[%s3 + $0x98] sm:$0xff]
    %v251 = vld [vmem:[%s3 + $0xa0] sm:$0xff]
    %v252 = vld [vmem:[%s3 + $0xa8] sm:$0xff]
    %v253 = vld [vmem:[%s3 + $0xb0] sm:$0xff]
    %v254 = vld [vmem:[%s3 + $0xb8] sm:$0xff]
    %v255 = vld [vmem:[%s3 + $0xc0] sm:$0xff]
    %v256 = vld [vmem:[%s3 + $0xc8] sm:$0xff]
    %v257 = vld [vmem:[%s3 + $0xd0] sm:$0xff]
    %v258 = vld [vmem:[%s3 + $0xd8] sm:$0xff]
    %v259 = vld [vmem:[%s3 + $0xe0] sm:$0xff]
    %v260 = vld [vmem:[%s3 + $0xe8] sm:$0xff]
    %v261 = vld [vmem:[%s3 + $0xf0] sm:$0xff]
    %v262 = vld [vmem:[%s3 + $0xf8] sm:$0xff]
    %v263 = vld [vmem:[%s3 + $0x100] sm:$0xff]
    %v264 = vld [vmem:[%s3 + $0x108] sm:$0xff]
    %v265 = vld [vmem:[%s3 + $0x110] sm:$0xff]
    %v266 = vld [vmem:[%s3 + $0x118] sm:$0xff]
    %v267 = vld [vmem:[%s3 + $0x120] sm:$0xff]
    %v268 = vld [vmem:[%s3 + $0x128] sm:$0xff]
    %v269 = vld [vmem:[%s3 + $0x130] sm:$0xff]
    %v270 = vld [vmem:[%s3 + $0x138] sm:$0xff]
    %v271 = vld [vmem:[%s3 + $0x140] sm:$0xff]
    %v272 = vld [vmem:[%s3 + $0x148] sm:$0xff]
    %v273 = vld [vmem:[%s3 + $0x150] sm:$0xff]
    %v274 = vld [vmem:[%s3 + $0x158] sm:$0xff]
    %v275 = vld [vmem:[%s3 + $0x160] sm:$0xff]
    %v276 = vld [vmem:[%s3 + $0x168] sm:$0xff]
    %v277 = vld [vmem:[%s3 + $0x170] sm:$0xff]
    %v278 = vld [vmem:[%s3 + $0x178] sm:$0xff]
    %v279 = vld [vmem:[%s4] sm:$0x1]
    %v281 = vlaneseq
    %v282 = vshrl.u32 %v281, 7
    %v283 = vsub.s32 0, %v282
    %v284 = vrot.slane %v279, %v283
    %286 = vmatprep.subr.mxu0 0.0
    %287 = vmatpush1.msra.mxu0 %v231
    %288 = vmatprep.subr.mxu0 0.0
    %289 = vmatpush1.msra.mxu0 %v232
    %290 = vmatprep.subr.mxu0 0.0
    %291 = vmatpush1.msra.mxu0 %v233
    %292 = vmatprep.subr.mxu0 0.0
    %293 = vmatpush1.msra.mxu0 %v234
    %294 = vmatprep.subr.mxu0 0.0
    %295 = vmatpush1.msra.mxu0 %v235
    %296 = vmatprep.subr.mxu0 0.0
    %297 = vmatpush1.msra.mxu0 %v236
    %298 = vmatprep.subr.mxu0 0.0
    %299 = vmatpush1.msra.mxu0 %v237
    %300 = vmatprep.subr.mxu0 0.0
    %301 = vmatpush1.msra.mxu0 %v238
    %302 = vmatprep.subr.mxu0 0.0
    %303 = vmatpush1.msra.mxu0 %v239
    %304 = vmatprep.subr.mxu0 0.0
    %305 = vmatpush1.msra.mxu0 %v240
    %306 = vmatprep.subr.mxu0 0.0
    %307 = vmatpush1.msra.mxu0 %v241
    %308 = vmatprep.subr.mxu0 0.0
    %309 = vmatpush1.msra.mxu0 %v242
    %310 = vmatprep.subr.mxu0 0.0
    %311 = vmatpush1.msra.mxu0 %v243
    %312 = vmatprep.subr.mxu0 0.0
    %313 = vmatpush1.msra.mxu0 %v244
    %314 = vmatprep.subr.mxu0 0.0
    %315 = vmatpush1.msra.mxu0 %v245
    %316 = vmatprep.subr.mxu0 0.0
    %317 = vmatpush1.msra.mxu0 %v246
    %318 = vmatprep.subr.mxu0 0.0
    %319 = vmatpush1.msra.mxu0 %v247
    %320 = vmatprep.subr.mxu0 0.0
    %321 = vmatpush1.msra.mxu0 %v248
    %322 = vmatprep.subr.mxu0 0.0
    %323 = vmatpush1.msra.mxu0 %v249
    %324 = vmatprep.subr.mxu0 0.0
    %325 = vmatpush1.msra.mxu0 %v250
    %326 = vmatprep.subr.mxu0 0.0
    %327 = vmatpush1.msra.mxu0 %v251
    %328 = vmatprep.subr.mxu0 0.0
    %329 = vmatpush1.msra.mxu0 %v252
    %330 = vmatprep.subr.mxu0 0.0
    %331 = vmatpush1.msra.mxu0 %v253
    %332 = vmatprep.subr.mxu0 0.0
    %333 = vmatpush1.msra.mxu0 %v254
    %334 = vmatprep.subr.mxu0 0.0
    %335 = vmatpush1.msra.mxu0 %v255
    %336 = vmatprep.subr.mxu0 0.0
    %337 = vmatpush1.msra.mxu0 %v256
    %338 = vmatprep.subr.mxu0 0.0
    %339 = vmatpush1.msra.mxu0 %v257
    %340 = vmatprep.subr.mxu0 0.0
    %341 = vmatpush1.msra.mxu0 %v258
    %342 = vmatprep.subr.mxu0 0.0
    %343 = vmatpush1.msra.mxu0 %v259
    %344 = vmatprep.subr.mxu0 0.0
    %345 = vmatpush1.msra.mxu0 %v260
    %346 = vmatprep.subr.mxu0 0.0
    %347 = vmatpush1.msra.mxu0 %v261
    %348 = vmatprep.subr.mxu0 0.0
    %349 = vmatpush1.msra.mxu0 %v262
    %350 = vmatprep.mubr.f32.mxu0 %v229
    %351 = vmatmul.mubr.f32.gmra.mrb[0].mxu0 %v228
    %v352 = vpop.f32.mrb[0].mxu0
    %v353 = vadd.f32 %v284, %v352
    %v354 = vpop.f32.mrb[0].mxu0
    %355 = vdwg.mxu0
    %356 = vmatprep.subr.mxu0 0.0
    %357 = vmatpush1.msra.mxu0 %v263
    %358 = vmatprep.subr.mxu0 0.0
    %359 = vmatpush1.msra.mxu0 %v264
    %360 = vmatprep.subr.mxu0 0.0
    %361 = vmatpush1.msra.mxu0 %v265
    %362 = vmatprep.subr.mxu0 0.0
    %363 = vmatpush1.msra.mxu0 %v266
    %364 = vmatprep.subr.mxu0 0.0
    %365 = vmatpush1.msra.mxu0 %v267
    %366 = vmatprep.subr.mxu0 0.0
    %367 = vmatpush1.msra.mxu0 %v268
    %368 = vmatprep.subr.mxu0 0.0
    %369 = vmatpush1.msra.mxu0 %v269
    %370 = vmatprep.subr.mxu0 0.0
    %371 = vmatpush1.msra.mxu0 %v270
    %372 = vmatprep.subr.mxu0 0.0
    %373 = vmatpush1.msra.mxu0 %v271
    %374 = vmatprep.subr.mxu0 0.0
    %375 = vmatpush1.msra.mxu0 %v272
    %376 = vmatprep.subr.mxu0 0.0
    %377 = vmatpush1.msra.mxu0 %v273
    %378 = vmatprep.subr.mxu0 0.0
    %379 = vmatpush1.msra.mxu0 %v274
    %380 = vmatprep.subr.mxu0 0.0
    %381 = vmatpush1.msra.mxu0 %v275
    %382 = vmatprep.subr.mxu0 0.0
    %383 = vmatpush1.msra.mxu0 %v276
    %384 = vmatprep.subr.mxu0 0.0
    %385 = vmatpush1.msra.mxu0 %v277
    %386 = vmatprep.subr.mxu0 0.0
    %387 = vmatpush1.msra.mxu0 %v278
    %388 = vmatprep.subr.mxu0 0.0
    %389 = vmatpush1.msra.mxu0 0.0
    %390 = vmatprep.subr.mxu0 0.0
    %391 = vmatpush1.msra.mxu0 0.0
    %392 = vmatprep.subr.mxu0 0.0
    %393 = vmatpush1.msra.mxu0 0.0
    %394 = vmatprep.subr.mxu0 0.0
    %395 = vmatpush1.msra.mxu0 0.0
    %396 = vmatprep.subr.mxu0 0.0
    %397 = vmatpush1.msra.mxu0 0.0
    %398 = vmatprep.subr.mxu0 0.0
    %399 = vmatpush1.msra.mxu0 0.0
    %400 = vmatprep.subr.mxu0 0.0
    %401 = vmatpush1.msra.mxu0 0.0
    %402 = vmatprep.subr.mxu0 0.0
    %403 = vmatpush1.msra.mxu0 0.0
    %404 = vmatprep.subr.mxu0 0.0
    %405 = vmatpush1.msra.mxu0 0.0
    %406 = vmatprep.subr.mxu0 0.0
    %407 = vmatpush1.msra.mxu0 0.0
    %408 = vmatprep.subr.mxu0 0.0
    %409 = vmatpush1.msra.mxu0 0.0
    %410 = vmatprep.subr.mxu0 0.0
    %411 = vmatpush1.msra.mxu0 0.0
    %412 = vmatprep.subr.mxu0 0.0
    %413 = vmatpush1.msra.mxu0 0.0
    %414 = vmatprep.subr.mxu0 0.0
    %415 = vmatpush1.msra.mxu0 0.0
    %416 = vmatprep.subr.mxu0 0.0
    %417 = vmatpush1.msra.mxu0 0.0
    %418 = vmatprep.subr.mxu0 0.0
    %419 = vmatpush1.msra.mxu0 0.0
    %420 = vmatprep.mubr.f32.mxu0 0.0
    %421 = vmatmul.mubr.f32.gmra.mrb[0].mxu0 %v230
    %v422 = vpop.f32.mrb[0].mxu0
    %v423 = vadd.f32 %v353, %v422
    %v424 = vpop.f32.mrb[0].mxu0
    %425 = vdwg.mxu0
    %vm426 = vcmask 785408
    %427 = vst.msk [vmem:[#allocation2] sm:$0xff] %vm426, %v423
    // Predicated region
    $region22: #{tpu_custom_call.1} parent=1 // pred_check
      _
    $region23: #{tpu_custom_call.1} parent=1 // pred_check_branch
      %429 = sbr.rel (0) target = $region25
    $region24: #{tpu_custom_call.1} parent=1 // pred_region
      %s431 = ssub.s32 128, 128
      %432 = vsyncadd [#allocation3], %s431
      %s434 = sshll.u32 [#allocation2], 4
      %s435 = int_to_ptr.vmem [resolvable:$true] %s434
      %437 = dma.vmem_to_hbm [thread:$0]  %s435, 128, %s5, [#allocation3]
    $region25: #{tpu_custom_call.1} parent=1 // pred_fallthru
      _
    // Predicated region
    $region26: #{tpu_custom_call.1} parent=1 // pred_check
      _
    $region27: #{tpu_custom_call.1} parent=1 // pred_check_branch
      %439 = sbr.rel (0) target = $region29
    $region28: #{tpu_custom_call.1} parent=1 // pred_region
      %440 = dma.done [#allocation3], 128
    $region29: #{tpu_custom_call.1} parent=1 // pred_fallthru
      _
    %441 = vsyncpa [#allocation3], 1

</llo_original>
